<compile_context>
chip_gen: v7x
topology: tpu7x:2x2x1
jax: 0.10.0
libtpu: 0.0.40
codegen_flags: <defaults>
</compile_context>

<pallas_src>
import math
import functools

import jax
import jax.numpy as jnp
from jax import lax
from jax.experimental import pallas as pl
from jax.experimental.pallas import tpu as pltpu


def _arc_margin_kernel(xn_ref, w_ref, label_ref, o_ref, *,
                       s, cos_m, sin_m, th, mm, easy_margin, ls_eps,
                       out_features, tile_n, matmul_dtype):
    # x was already L2-normalized in the wrapper (hoisted out of the N loop).
    xn = xn_ref[...]                                     # (TILE_B, D) f32

    # Normalize this streamed tile of W: rsqrt-multiply (no full-width divide).
    w = w_ref[...].astype(jnp.float32)                   # (TILE_N, D)
    w_sumsq = jnp.sum(w * w, axis=-1, keepdims=True)
    wn = w * lax.rsqrt(jnp.maximum(w_sumsq, 1e-24))

    # cosine = xn @ wn^T expressed as a D-contraction (no transpose in VMEM).
    cosine = lax.dot_general(
        xn.astype(matmul_dtype), wn.astype(matmul_dtype),
        dimension_numbers=(((1,), (1,)), ((), ())),
        preferred_element_type=jnp.float32)              # (TILE_B, TILE_N) f32

    # sine/phi. Clamp 1 - c^2 at 0: |cosine| can exceed 1 by a few ULP.
    sine = jnp.sqrt(jnp.maximum(1.0 - cosine * cosine, 0.0))
    phi = cosine * cos_m - sine * sin_m
    if easy_margin:
        phi = jnp.where(cosine > 0.0, phi, cosine)
    else:
        phi = jnp.where(cosine > th, phi, cosine - mm)

    # one-hot via globally-offset column index == label for this N tile.
    label = label_ref[...]                               # (TILE_B, 1) int32
    col = lax.broadcasted_iota(jnp.int32, cosine.shape, 1) + pl.program_id(1) * tile_n
    match = col == label

    if ls_eps > 0.0:
        one_hot = (1.0 - ls_eps) * match.astype(jnp.float32) + (ls_eps / out_features)
        out = cosine + one_hot * (phi - cosine)
    else:
        out = jnp.where(match, phi, cosine)

    o_ref[...] = (out * s).astype(o_ref.dtype)


def arc_margin_product(x, weight, label, *, s, m, easy_margin, ls_eps,
                       tile_b=128, tile_n=2048, matmul_dtype=jnp.float32):
    """Pallas implementation of ArcMarginProduct.forward.

    x:      (B, in_features)
    weight: (out_features, in_features)   (pass bf16 to halve W HBM traffic)
    label:  (B,) integer class indices
    returns (B, out_features) float32

    matmul_dtype: dtype fed to the MXU (f32 accumulate regardless). Default
    float32 matches the PyTorch reference exactly; jnp.bfloat16 roughly doubles
    throughput for large N at a small accuracy cost.
    """
    B, D = x.shape
    N, D2 = weight.shape
    assert D == D2, "in_features mismatch"

    tile_b = min(tile_b, B)
    tile_n = min(tile_n, N)
    # (8,128) tiling constraint: block dims must divide evenly or be full-extent.
    assert B % tile_b == 0 and (tile_b % 8 == 0 or tile_b == B)
    assert N % tile_n == 0 and (tile_n % 128 == 0 or tile_n == N)
    grid = (B // tile_b, N // tile_n)   # N axis last => W streams fastest,
                                        # x tile stays resident across N tiles.

    # Hoist x normalization out of the per-N-tile loop (tiny B x D op).
    x32 = x.astype(jnp.float32)
    x_sumsq = jnp.sum(x32 * x32, axis=-1, keepdims=True)
    xn = x32 * lax.rsqrt(jnp.maximum(x_sumsq, 1e-24))

    label2d = label.astype(jnp.int32).reshape(B, 1)

    kernel = functools.partial(
        _arc_margin_kernel,
        s=float(s),
        cos_m=math.cos(m),
        sin_m=math.sin(m),
        th=math.cos(math.pi - m),
        mm=math.sin(math.pi - m) * m,
        easy_margin=bool(easy_margin),
        ls_eps=float(ls_eps),
        out_features=N,
        tile_n=tile_n,
        matmul_dtype=matmul_dtype,
    )

    # VMEM budget: double-buffered x/W/out tiles + headroom.
    w_itemsize = jnp.dtype(weight.dtype).itemsize
    tile_bytes = 2 * (tile_n * D * w_itemsize + tile_b * D * 4 + tile_b * tile_n * 4)
    vmem_limit = int(min(max(tile_bytes + (4 << 20), 32 << 20), 120 << 20))

    cost = pl.CostEstimate(
        flops=2 * B * N * D + 12 * B * N,
        transcendentals=B * N + N * grid[0],
        bytes_accessed=int(xn.size * 4 + weight.size * w_itemsize * grid[0]
                           + B * N * 4 + B * 4),
    )

    return pl.pallas_call(
        kernel,
        out_shape=jax.ShapeDtypeStruct((B, N), jnp.float32),
        grid=grid,
        in_specs=[
            pl.BlockSpec((tile_b, D), lambda i, j: (i, 0)),   # xn: resident per row-block
            pl.BlockSpec((tile_n, D), lambda i, j: (j, 0)),   # W : streamed over N
            pl.BlockSpec((tile_b, 1), lambda i, j: (i, 0)),   # labels (tiny)
        ],
        out_specs=pl.BlockSpec((tile_b, tile_n), lambda i, j: (i, j)),
        compiler_params=pltpu.CompilerParams(
            dimension_semantics=("parallel", "parallel"),
            vmem_limit_bytes=vmem_limit),
        cost_estimate=cost,
    )(xn, weight, label2d)


def _reference(x, weight, label, *, s, m, easy_margin, ls_eps):
    """Pure-JAX reference matching the PyTorch module."""
    x = x.astype(jnp.float32)
    w = weight.astype(jnp.float32)
    xn = x / jnp.maximum(jnp.linalg.norm(x, axis=-1, keepdims=True), 1e-12)
    wn = w / jnp.maximum(jnp.linalg.norm(w, axis=-1, keepdims=True), 1e-12)
    cosine = xn @ wn.T
    sine = jnp.sqrt(jnp.maximum(1.0 - cosine * cosine, 0.0))
    phi = cosine * math.cos(m) - sine * math.sin(m)
    if easy_margin:
        phi = jnp.where(cosine > 0.0, phi, cosine)
    else:
        th = math.cos(math.pi - m)
        mm = math.sin(math.pi - m) * m
        phi = jnp.where(cosine > th, phi, cosine - mm)
    one_hot = jax.nn.one_hot(label, w.shape[0], dtype=jnp.float32)
    if ls_eps > 0:
        one_hot = (1.0 - ls_eps) * one_hot + ls_eps / w.shape[0]
    return (one_hot * phi + (1.0 - one_hot) * cosine) * s


if __name__ == "__main__":
    # Small shapes consistent with the module (still exercising the grid).
    B = 8
    IN_FEATURES = 128
    OUT_FEATURES = 512
    S = 30.0
    M = 0.5
    EASY_MARGIN = False
    LS_EPS = 0.1

    key = jax.random.PRNGKey(0)
    kx, kw, kl = jax.random.split(key, 3)

    # Deterministic xavier_uniform_-style init for weight (out_features, in_features).
    bound = math.sqrt(6.0 / (IN_FEATURES + OUT_FEATURES))
    weight = jax.random.uniform(
        kw, (OUT_FEATURES, IN_FEATURES), jnp.float32, minval=-bound, maxval=bound)
    x = jax.random.normal(kx, (B, IN_FEATURES), jnp.float32)
    label = jax.random.randint(kl, (B,), 0, OUT_FEATURES, jnp.int32)

    out = arc_margin_product(
        x, weight, label, s=S, m=M, easy_margin=EASY_MARGIN, ls_eps=LS_EPS,
        tile_b=128, tile_n=256)   # tile_n < N => grid=(1, 2) exercises tiling
    out = jax.block_until_ready(out)

    ref = _reference(x, weight, label, s=S, m=M,
                     easy_margin=EASY_MARGIN, ls_eps=LS_EPS)
    assert out.shape == (B, OUT_FEATURES) and out.dtype == jnp.float32
    assert bool(jnp.allclose(out, ref, rtol=1e-3, atol=1e-2)), "mismatch vs reference"
    print("KERNEL_OK")
</pallas_src>

<mosaic_0001>
module attributes {stable_mosaic.version = 11 : i64} {
  func.func @_arc_margin_kernel(%arg0: i32, %arg1: i32, %arg2: memref<8x128xf32, #tpu.memory_space<vmem>>, %arg3: memref<256x128xf32, #tpu.memory_space<vmem>>, %arg4: memref<8x1xi32, #tpu.memory_space<vmem>>, %arg5: memref<8x256xf32, #tpu.memory_space<vmem>>) attributes {dimension_semantics = [#tpu.dimension_semantics<parallel>, #tpu.dimension_semantics<parallel>], iteration_bounds = array<i64: 1, 2>, scalar_prefetch = 0 : i64, scratch_operands = 0 : i64, tpu.core_type = #tpu.core_type<tc>, window_params = [{transform_indices = @transform_0, window_bounds = array<i64: 8, 128>}, {transform_indices = @transform_1, window_bounds = array<i64: 256, 128>}, {transform_indices = @transform_2, window_bounds = array<i64: 8, 1>}, {transform_indices = @transform_3, window_bounds = array<i64: 8, 256>}]} {
    %c0 = arith.constant 0 : index
    %c0_0 = arith.constant 0 : index
    %0 = vector.load %arg2[%c0, %c0_0] : memref<8x128xf32, #tpu.memory_space<vmem>>, vector<8x128xf32>
    %c0_1 = arith.constant 0 : index
    %c0_2 = arith.constant 0 : index
    %1 = vector.load %arg3[%c0_1, %c0_2] : memref<256x128xf32, #tpu.memory_space<vmem>>, vector<256x128xf32>
    %2 = arith.mulf %1, %1 : vector<256x128xf32>
    %cst = arith.constant dense<0.000000e+00> : vector<256xf32>
    %3 = vector.multi_reduction <add>, %2, %cst [1] : vector<256x128xf32> to vector<256xf32>
    %4 = vector.shape_cast %3 : vector<256xf32> to vector<256x1xf32>
    %cst_3 = arith.constant 1.000000e-24 : f32
    %5 = vector.broadcast %cst_3 : f32 to vector<256x1xf32>
    %6 = arith.maximumf %4, %5 : vector<256x1xf32>
    %7 = math.rsqrt %6 : vector<256x1xf32>
    %8 = vector.broadcast %7 : vector<256x1xf32> to vector<256x128xf32>
    %9 = arith.mulf %1, %8 : vector<256x128xf32>
    %cst_4 = arith.constant dense<0.000000e+00> : vector<8x256xf32>
    %10 = tpu.matmul %0, %9, %cst_4 {dimension_numbers = #tpu.dot_dimension_numbers<[1], [1], [0], [0], [0, 0, 1, 0], [], []>} : vector<8x128xf32>, vector<256x128xf32>, vector<8x256xf32> -> vector<8x256xf32>
    %11 = arith.mulf %10, %10 : vector<8x256xf32>
    %cst_5 = arith.constant 1.000000e+00 : f32
    %12 = vector.broadcast %cst_5 : f32 to vector<8x256xf32>
    %13 = arith.subf %12, %11 : vector<8x256xf32>
    %cst_6 = arith.constant 0.000000e+00 : f32
    %14 = vector.broadcast %cst_6 : f32 to vector<8x256xf32>
    %15 = arith.maximumf %13, %14 : vector<8x256xf32>
    %16 = math.sqrt %15 : vector<8x256xf32>
    %cst_7 = arith.constant 0.87758255 : f32
    %17 = vector.broadcast %cst_7 : f32 to vector<8x256xf32>
    %18 = arith.mulf %10, %17 : vector<8x256xf32>
    %cst_8 = arith.constant 0.47942555 : f32
    %19 = vector.broadcast %cst_8 : f32 to vector<8x256xf32>
    %20 = arith.mulf %16, %19 : vector<8x256xf32>
    %21 = arith.subf %18, %20 : vector<8x256xf32>
    %cst_9 = arith.constant -0.87758255 : f32
    %22 = vector.broadcast %cst_9 : f32 to vector<8x256xf32>
    %23 = arith.cmpf ogt, %10, %22 : vector<8x256xf32>
    %cst_10 = arith.constant 0.239712775 : f32
    %24 = vector.broadcast %cst_10 : f32 to vector<8x256xf32>
    %25 = arith.subf %10, %24 : vector<8x256xf32>
    %26 = arith.select %23, %21, %25 : vector<8x256xi1>, vector<8x256xf32>
    %c0_11 = arith.constant 0 : index
    %c0_12 = arith.constant 0 : index
    %27 = vector.load %arg4[%c0_11, %c0_12] : memref<8x1xi32, #tpu.memory_space<vmem>>, vector<8x1xi32>
    %28 = tpu.iota {dimensions = array<i32: 1>} : vector<8x256xi32>
    %c256_i32 = arith.constant 256 : i32
    %29 = arith.muli %arg1, %c256_i32 : i32
    %30 = vector.broadcast %29 : i32 to vector<8x256xi32>
    %31 = arith.addi %28, %30 : vector<8x256xi32>
    %32 = vector.broadcast %27 : vector<8x1xi32> to vector<8x256xi32>
    %33 = arith.cmpi eq, %31, %32 : vector<8x256xi32>
    %34 = arith.extui %33 : vector<8x256xi1> to vector<8x256xi32>
    %35 = arith.sitofp %34 : vector<8x256xi32> to vector<8x256xf32>
    %cst_13 = arith.constant 0.899999976 : f32
    %36 = vector.broadcast %cst_13 : f32 to vector<8x256xf32>
    %37 = arith.mulf %36, %35 : vector<8x256xf32>
    %cst_14 = arith.constant 1.95312503E-4 : f32
    %38 = vector.broadcast %cst_14 : f32 to vector<8x256xf32>
    %39 = arith.addf %37, %38 : vector<8x256xf32>
    %40 = arith.subf %26, %10 : vector<8x256xf32>
    %41 = arith.mulf %39, %40 : vector<8x256xf32>
    %42 = arith.addf %10, %41 : vector<8x256xf32>
    %cst_15 = arith.constant 3.000000e+01 : f32
    %43 = vector.broadcast %cst_15 : f32 to vector<8x256xf32>
    %44 = arith.mulf %42, %43 : vector<8x256xf32>
    %c0_16 = arith.constant 0 : index
    %c0_17 = arith.constant 0 : index
    %45 = vector.load %arg5[%c0_16, %c0_17] : memref<8x256xf32, #tpu.memory_space<vmem>>, vector<8x256xf32>
    tpu.vector_store %arg5[%c0_16, %c0_17], %44 {strides = array<i32>} : memref<8x256xf32, #tpu.memory_space<vmem>>, vector<8x256xf32>,
    return
  }
  func.func @transform_0(%arg0: i32, %arg1: i32) -> (i32, i32) {
    %c0_i32 = arith.constant 0 : i32
    %c0_i32_0 = arith.constant 0 : i32
    return %arg0, %c0_i32 : i32, i32
  }
  func.func @transform_1(%arg0: i32, %arg1: i32) -> (i32, i32) {
    %c0_i32 = arith.constant 0 : i32
    %c0_i32_0 = arith.constant 0 : i32
    return %arg1, %c0_i32 : i32, i32
  }
  func.func @transform_2(%arg0: i32, %arg1: i32) -> (i32, i32) {
    %c0_i32 = arith.constant 0 : i32
    %c0_i32_0 = arith.constant 0 : i32
    return %arg0, %c0_i32 : i32, i32
  }
  func.func @transform_3(%arg0: i32, %arg1: i32) -> (i32, i32) {
    %c0_i32 = arith.constant 0 : i32
    return %arg0, %arg1 : i32, i32
  }
}

</mosaic_0001>

<llo_original>
// kernel: tpu_custom_call.1
$region0: #{tpu_custom_call.1}
  #allocation0 [shape = 'u32[]', space=smem, size = 0x4, offset = 0x4, fixed_abs, tag = 'smem constant byte address 0x4 - core index']
  #allocation1 [shape = 'u32[144,128]{1,0:T(1,128)}', space=vmem, size = 0x12000, scoped, tag = 'internal scratch']
  %s0 = inlined_call_operand.vmem [shape: f32[8,128], index: 0, kind: input, shape index: {}]
  %s1 = inlined_call_operand.hbm [shape: f32[512,128], index: 1, kind: input, shape index: {}]
  %s2 = inlined_call_operand.vmem [shape: s32[8,1], index: 2, kind: input, shape index: {}]
  %s3 = inlined_call_operand.hbm [shape: f32[8,512], index: 3, kind: output, shape index: {}]
  %s4 = sld [smem:[#allocation0]]
  $region49: #{tpu_custom_call.1} parent=0
    _
  %s6 = ssub.s32 1, %s4
  %s7 = scalar_select 0, %s6, %s4
  $region1: #{tpu_custom_call.1} parent=0
    #allocation2 [shape = 'u8[262144]{0}', space=vmem, size = 0x40000, scoped, tag = 'input window, operand 1']
    #allocation3 [shape = 's32[2]{0}', space=sflag, size = 0x8, scoped, tag = 'scoped memory for tpu_custom_call.1']
    #allocation4 [shape = 's32[2]{0}', space=sflag, size = 0x8, scoped, tag = 'scoped memory for tpu_custom_call.1']
    #allocation5 [shape = 'u8[16384]{0}', space=vmem, size = 0x4000, scoped, tag = 'output window, operand 0']
    %8 = vsyncpa [#allocation3], 0
    %s9 = scalar_lea.sflag [#allocation3], 1
    %10 = vsyncpa %s9, 0
    %11 = vsyncpa [#allocation4], 0
    %s12 = scalar_lea.sflag [#allocation4], 1
    %13 = vsyncpa %s12, 0
    loop: start=0, step=1, limit=4
    $region2: #{tpu_custom_call.1} parent=1 // loop_pre_header
      _
    $region3: #{tpu_custom_call.1} parent=1 // loop_header
      %s15 = sphi 0, %s19
      %p16 = scmp.ge.s32.totalorder %s15, 4
      %s22 = sphi 0, %s34
      %s23 = sphi 0, %s30
      %s24 = sphi 0, %s22
      %s25 = sphi 0, %s23
      %s26 = sphi 0, %s24
      %s27 = sphi 0, %s25
      %s37 = sphi 0, %s39
      %s40 = sphi 0, %s37
      %s41 = sphi 0, %s40
      %s57 = sphi 0, %s41
      %s63 = sphi 0, %s65
      %s66 = sphi 0, %s63
      %s67 = sphi 0, %s66
      %s83 = sphi 0, %s67
      %s89 = sphi 0, %s91
      %s92 = sphi 0, %s89
      %s93 = sphi 0, %s92
      %s109 = sphi 0, %s93
      %s117 = sphi 0, %s119
      %s120 = sphi 0, %s117
      %s121 = sphi 0, %s120
      %s137 = sphi 0, %s121
    $region4: #{tpu_custom_call.1} parent=1 // loop_header_branch
      %18 = sbr.rel (%p16) target = $region8
    $region5: #{tpu_custom_call.1} parent=1 // loop_body
      %s20 = ssub.s32 %s15, 1
      %s21 = ssub.s32 %s15, 2
      %s28 = sadd.s32 1, %s23
      %p29 = scmp.ge.s32.totalorder %s28, 2
      %s30 = scalar_select %p29, 0, %s28
      %s31 = sadd.s32 1, %s22
      %s32 = scalar_select %p29, %s31, %s22
      %p33 = scmp.ge.s32.totalorder %s32, 1
      %s34 = scalar_select %p33, 0, %s32
      %s35 = ssub.s32 %s22, %s34
      %p36 = scmp.eq.s32.totalorder %s35, 0
      %s38 = sadd.s32 %s37, 1
      %s39 = scalar_select %p36, %s37, %s38
      %p42 = pneg %p36
      %p43 = scmp.eq.s32.totalorder %s15, 1
      %p44 = por %p42, %p43
      %p45 = scmp.ne.s32.totalorder %s37, %s40
      %p46 = scmp.eq.s32.totalorder %s15, 0
      %p47 = por %p45, %p46
      %p48 = scmp.ne.s32.totalorder %s37, %s40
      %p49 = scmp.eq.s32.totalorder %s20, 1
      %p50 = por %p48, %p49
      %p51 = scmp.ne.s32.totalorder %s40, %s41
      %p52 = scmp.eq.s32.totalorder %s20, 0
      %p53 = por %p51, %p52
      %p54 = scmp.ne.s32.totalorder %s40, %s41
      %p55 = scmp.eq.s32.totalorder %s21, 1
      %p56 = por %p54, %p55
      %p58 = scmp.ne.s32.totalorder %s41, %s57
      %p59 = scmp.eq.s32.totalorder %s21, 0
      %p60 = por %p58, %p59
      %s61 = ssub.s32 %s23, %s30
      %p62 = scmp.eq.s32.totalorder %s61, 0
      %s64 = sadd.s32 %s63, 1
      %s65 = scalar_select %p62, %s63, %s64
      %p68 = pneg %p62
      %p69 = scmp.eq.s32.totalorder %s15, 1
      %p70 = por %p68, %p69
      %p71 = scmp.ne.s32.totalorder %s63, %s66
      %p72 = scmp.eq.s32.totalorder %s15, 0
      %p73 = por %p71, %p72
      %p74 = scmp.ne.s32.totalorder %s63, %s66
      %p75 = scmp.eq.s32.totalorder %s20, 1
      %p76 = por %p74, %p75
      %p77 = scmp.ne.s32.totalorder %s66, %s67
      %p78 = scmp.eq.s32.totalorder %s20, 0
      %p79 = por %p77, %p78
      %p80 = scmp.ne.s32.totalorder %s66, %s67
      %p81 = scmp.eq.s32.totalorder %s21, 1
      %p82 = por %p80, %p81
      %p84 = scmp.ne.s32.totalorder %s67, %s83
      %p85 = scmp.eq.s32.totalorder %s21, 0
      %p86 = por %p84, %p85
      %s87 = ssub.s32 %s22, %s34
      %p88 = scmp.eq.s32.totalorder %s87, 0
      %s90 = sadd.s32 %s89, 1
      %s91 = scalar_select %p88, %s89, %s90
      %p94 = pneg %p88
      %p95 = scmp.eq.s32.totalorder %s15, 1
      %p96 = por %p94, %p95
      %p97 = scmp.ne.s32.totalorder %s89, %s92
      %p98 = scmp.eq.s32.totalorder %s15, 0
      %p99 = por %p97, %p98
      %p100 = scmp.ne.s32.totalorder %s89, %s92
      %p101 = scmp.eq.s32.totalorder %s20, 1
      %p102 = por %p100, %p101
      %p103 = scmp.ne.s32.totalorder %s92, %s93
      %p104 = scmp.eq.s32.totalorder %s20, 0
      %p105 = por %p103, %p104
      %p106 = scmp.ne.s32.totalorder %s92, %s93
      %p107 = scmp.eq.s32.totalorder %s21, 1
      %p108 = por %p106, %p107
      %p110 = scmp.ne.s32.totalorder %s93, %s109
      %p111 = scmp.eq.s32.totalorder %s21, 0
      %p112 = por %p110, %p111
      %s113 = ssub.s32 %s22, %s34
      %s114 = ssub.s32 %s23, %s30
      %s115 = sor.u32 %s113, %s114
      %p116 = scmp.eq.s32.totalorder %s115, 0
      %s118 = sadd.s32 %s117, 1
      %s119 = scalar_select %p116, %s117, %s118
      %p122 = pneg %p116
      %p123 = scmp.eq.s32.totalorder %s15, 1
      %p124 = por %p122, %p123
      %p125 = scmp.ne.s32.totalorder %s117, %s120
      %p126 = scmp.eq.s32.totalorder %s15, 0
      %p127 = por %p125, %p126
      %p128 = scmp.ne.s32.totalorder %s117, %s120
      %p129 = scmp.eq.s32.totalorder %s20, 1
      %p130 = por %p128, %p129
      %p131 = scmp.ne.s32.totalorder %s120, %s121
      %p132 = scmp.eq.s32.totalorder %s20, 0
      %p133 = por %p131, %p132
      %p134 = scmp.ne.s32.totalorder %s120, %s121
      %p135 = scmp.eq.s32.totalorder %s21, 1
      %p136 = por %p134, %p135
      %p138 = scmp.ne.s32.totalorder %s121, %s137
      %p139 = scmp.eq.s32.totalorder %s21, 0
      %p140 = por %p138, %p139
      %p141 = scmp.le.s32.totalorder 1, %s15
      %p142 = scmp.lt.s32.totalorder %s15, 3
      %p143 = pnand %p141, %p142
      %p144 = pneg %p143
      // Predicated region
      $region9: #{tpu_custom_call.1} parent=5 // pred_check
        _
      $region10: #{tpu_custom_call.1} parent=5 // pred_check_branch
        %146 = sbr.rel (%p143) target = $region12
      $region11: #{tpu_custom_call.1} parent=5 // pred_region
        %s147 = ssub.s32 %s15, 1
        // Predicated region
        $region13: #{tpu_custom_call.1} parent=11 // pred_check
          %p148 = pneg %p53
        $region14: #{tpu_custom_call.1} parent=11 // pred_check_branch
          %150 = sbr.rel (%p148) target = $region16
        $region15: #{tpu_custom_call.1} parent=11 // pred_region
          %p151 = scmp.lt.s32.totalorder %s24, 0
          %s152 = scalar_select %p151, %s24, 0
          %s153 = smul.addr %s152, 8
          %s154 = scalar_lea.vmem %s0, %s153
        $region16: #{tpu_custom_call.1} parent=11 // pred_fallthru
          _
        // Predicated region
        $region17: #{tpu_custom_call.1} parent=11 // pred_check
          %p155 = pneg %p105
        $region18: #{tpu_custom_call.1} parent=11 // pred_check_branch
          %157 = sbr.rel (%p155) target = $region20
        $region19: #{tpu_custom_call.1} parent=11 // pred_region
          %p158 = scmp.lt.s32.totalorder %s24, 0
          %s159 = scalar_select %p158, %s24, 0
          %s160 = smul.addr %s159, 8
          %s161 = scalar_lea.vmem %s2, %s160
        $region20: #{tpu_custom_call.1} parent=11 // pred_fallthru
          _
      $region12: #{tpu_custom_call.1} parent=5 // pred_fallthru
        _
      %p162 = scmp.lt.s32.totalorder %s15, 2
      // Predicated region
      $region21: #{tpu_custom_call.1} parent=5 // pred_check
        %p163 = pneg %p162
      $region22: #{tpu_custom_call.1} parent=5 // pred_check_branch
        %165 = sbr.rel (%p163) target = $region24
      $region23: #{tpu_custom_call.1} parent=5 // pred_region
        // Predicated region
        $region25: #{tpu_custom_call.1} parent=23 // pred_check
          %p166 = pneg %p73
        $region26: #{tpu_custom_call.1} parent=23 // pred_check_branch
          %168 = sbr.rel (%p166) target = $region28
        $region27: #{tpu_custom_call.1} parent=23 // pred_region
          %s169 = sand.u32 %s63, 1
          %s170 = scalar_lea.sflag [#allocation3], %s169
          %s171 = sand.u32 %s63, 1
          %s172 = smul.addr %s171, 256
          %s173 = scalar_lea.vmem [#allocation2], %s172
          %s174 = smul.u32 32, %s23
          %s176 = ssub.s32 4096, 4096
          %177 = vsyncadd %s170, %s176
          %s178 = smul.addr %s174, 128
          %s179 = scalar_lea.hbm %s1, %s178
          %s180 = sshll.u32 %s173, 4
          %s181 = int_to_ptr.vmem [resolvable:$true] %s180
          %186 = dma.hbm_to_vmem [thread:$0]  %s179, 4096, %s181, %s170, 128, 128, 8
        $region28: #{tpu_custom_call.1} parent=23 // pred_fallthru
          _
      $region24: #{tpu_custom_call.1} parent=5 // pred_fallthru
        _
      %p187 = scmp.le.s32.totalorder 1, %s15
      %p188 = scmp.lt.s32.totalorder %s15, 3
      %p189 = pnand %p187, %p188
      %p190 = pneg %p189
      // Predicated region
      $region29: #{tpu_custom_call.1} parent=5 // pred_check
        _
      $region30: #{tpu_custom_call.1} parent=5 // pred_check_branch
        %192 = sbr.rel (%p189) target = $region32
      $region31: #{tpu_custom_call.1} parent=5 // pred_region
        %s193 = ssub.s32 %s15, 1
        %s194 = sand.u32 %s66, 1
        %s195 = scalar_lea.sflag [#allocation3], %s194
        %s196 = sand.u32 %s66, 1
        %s197 = smul.addr %s196, 256
        %s198 = scalar_lea.vmem [#allocation2], %s197
        // Predicated region
        $region33: #{tpu_custom_call.1} parent=31 // pred_check
          %p199 = pneg %p79
        $region34: #{tpu_custom_call.1} parent=31 // pred_check_branch
          %201 = sbr.rel (%p199) target = $region36
        $region35: #{tpu_custom_call.1} parent=31 // pred_region
          %202 = dma.done %s195, 4096
        $region36: #{tpu_custom_call.1} parent=31 // pred_fallthru
          _
        %p203 = scmp.lt.s32.totalorder %s24, 0
        %s204 = scalar_select %p203, %s24, 0
        %s205 = smul.addr %s204, 8
        %s206 = scalar_lea.vmem %s0, %s205
        %p207 = pneg %p53
        %p208 = pneg %p50
        %s209 = sand.u32 %s66, 1
        %s210 = scalar_lea.sflag [#allocation3], %s209
        %s211 = sand.u32 %s66, 1
        %s212 = smul.addr %s211, 256
        %s213 = scalar_lea.vmem [#allocation2], %s212
        %p214 = pneg %p79
        %p215 = pneg %p76
        %p216 = scmp.lt.s32.totalorder %s24, 0
        %s217 = scalar_select %p216, %s24, 0
        %s218 = smul.addr %s217, 8
        %s219 = scalar_lea.vmem %s2, %s218
        %p220 = pneg %p105
        %p221 = pneg %p102
        %p222 = pneg %p133
        %p223 = pneg %p130
        %s224 = sand.u32 %s120, 1
        %s225 = scalar_lea.sflag [#allocation4], %s224
        %s226 = sand.u32 %s120, 1
        %s227 = smul.addr %s226, 16
        %s228 = scalar_lea.vmem [#allocation5], %s227
        %p229 = scmp.lt.s32.totalorder %s24, 0
        %s230 = scalar_select %p229, %s24, 0
        %s231 = smul.addr %s230, 8
        %s232 = scalar_lea.vmem %s0, %s231
        %s233 = smul.u32 32, %s25
        %p234 = scmp.lt.s32.totalorder %s24, 0
        %s235 = scalar_select %p234, %s24, 0
        %s236 = smul.addr %s235, 8
        %s237 = scalar_lea.vmem %s2, %s236
        %s238 = smul.u32 2, %s25
        %v239 = vld [vmem:[%s232] sm:$0xff]
        %v240 = vld [vmem:[%s198] sm:$0xff]
        %v241 = vld [vmem:[%s198 + $0x8] sm:$0xff]
        %v242 = vld [vmem:[%s198 + $0x10] sm:$0xff]
        %v243 = vld [vmem:[%s198 + $0x18] sm:$0xff]
        %v244 = vld [vmem:[%s198 + $0x20] sm:$0xff]
        %v245 = vld [vmem:[%s198 + $0x28] sm:$0xff]
        %v246 = vld [vmem:[%s198 + $0x30] sm:$0xff]
        %v247 = vld [vmem:[%s198 + $0x38] sm:$0xff]
        %v248 = vld [vmem:[%s198 + $0x40] sm:$0xff]
        %v249 = vld [vmem:[%s198 + $0x48] sm:$0xff]
        %v250 = vld [vmem:[%s198 + $0x50] sm:$0xff]
        %v251 = vld [vmem:[%s198 + $0x58] sm:$0xff]
        %v252 = vld [vmem:[%s198 + $0x60] sm:$0xff]
        %v253 = vld [vmem:[%s198 + $0x68] sm:$0xff]
        %v254 = vld [vmem:[%s198 + $0x70] sm:$0xff]
        %v255 = vld [vmem:[%s198 + $0x78] sm:$0xff]
        %v256 = vld [vmem:[%s198 + $0x80] sm:$0xff]
        %v257 = vld [vmem:[%s198 + $0x88] sm:$0xff]
        %v258 = vld [vmem:[%s198 + $0x90] sm:$0xff]
        %v259 = vld [vmem:[%s198 + $0x98] sm:$0xff]
        %v260 = vld [vmem:[%s198 + $0xa0] sm:$0xff]
        %v261 = vld [vmem:[%s198 + $0xa8] sm:$0xff]
        %v262 = vld [vmem:[%s198 + $0xb0] sm:$0xff]
        %v263 = vld [vmem:[%s198 + $0xb8] sm:$0xff]
        %v264 = vld [vmem:[%s198 + $0xc0] sm:$0xff]
        %v265 = vld [vmem:[%s198 + $0xc8] sm:$0xff]
        %v266 = vld [vmem:[%s198 + $0xd0] sm:$0xff]
        %v267 = vld [vmem:[%s198 + $0xd8] sm:$0xff]
        %v268 = vld [vmem:[%s198 + $0xe0] sm:$0xff]
        %v269 = vld [vmem:[%s198 + $0xe8] sm:$0xff]
        %v270 = vld [vmem:[%s198 + $0xf0] sm:$0xff]
        %v271 = vld [vmem:[%s198 + $0xf8] sm:$0xff]
        %v272 = vmul.f32 %v240, %v240
        %v273 = vmul.f32 %v241, %v241
        %v274 = vmul.f32 %v242, %v242
        %v275 = vmul.f32 %v243, %v243
        %v276 = vmul.f32 %v244, %v244
        %v277 = vmul.f32 %v245, %v245
        %v278 = vmul.f32 %v246, %v246
        %v279 = vmul.f32 %v247, %v247
        %v280 = vmul.f32 %v248, %v248
        %v281 = vmul.f32 %v249, %v249
        %v282 = vmul.f32 %v250, %v250
        %v283 = vmul.f32 %v251, %v251
        %v284 = vmul.f32 %v252, %v252
        %v285 = vmul.f32 %v253, %v253
        %v286 = vmul.f32 %v254, %v254
        %v287 = vmul.f32 %v255, %v255
        %v288 = vmul.f32 %v256, %v256
        %v289 = vmul.f32 %v257, %v257
        %v290 = vmul.f32 %v258, %v258
        %v291 = vmul.f32 %v259, %v259
        %v292 = vmul.f32 %v260, %v260
        %v293 = vmul.f32 %v261, %v261
        %v294 = vmul.f32 %v262, %v262
        %v295 = vmul.f32 %v263, %v263
        %v296 = vmul.f32 %v264, %v264
        %v297 = vmul.f32 %v265, %v265
        %v298 = vmul.f32 %v266, %v266
        %v299 = vmul.f32 %v267, %v267
        %v300 = vmul.f32 %v268, %v268
        %v301 = vmul.f32 %v269, %v269
        %v302 = vmul.f32 %v270, %v270
        %v303 = vmul.f32 %v271, %v271
        %304 = vadd.xlane.f32.xlu0 %v272
        %v305 = vpop.xlane.xlu0 %304
        %306 = vadd.xlane.f32.xlu0 %v273
        %v307 = vpop.xlane.xlu0 %306
        %308 = vadd.xlane.f32.xlu0 %v274
        %v309 = vpop.xlane.xlu0 %308
        %310 = vadd.xlane.f32.xlu0 %v275
        %v311 = vpop.xlane.xlu0 %310
        %312 = vadd.xlane.f32.xlu0 %v276
        %v313 = vpop.xlane.xlu0 %312
        %314 = vadd.xlane.f32.xlu0 %v277
        %v315 = vpop.xlane.xlu0 %314
        %316 = vadd.xlane.f32.xlu0 %v278
        %v317 = vpop.xlane.xlu0 %316
        %318 = vadd.xlane.f32.xlu0 %v279
        %v319 = vpop.xlane.xlu0 %318
        %320 = vadd.xlane.f32.xlu0 %v280
        %v321 = vpop.xlane.xlu0 %320
        %322 = vadd.xlane.f32.xlu0 %v281
        %v323 = vpop.xlane.xlu0 %322
        %324 = vadd.xlane.f32.xlu0 %v282
        %v325 = vpop.xlane.xlu0 %324
        %326 = vadd.xlane.f32.xlu0 %v283
        %v327 = vpop.xlane.xlu0 %326
        %328 = vadd.xlane.f32.xlu0 %v284
        %v329 = vpop.xlane.xlu0 %328
        %330 = vadd.xlane.f32.xlu0 %v285
        %v331 = vpop.xlane.xlu0 %330
        %332 = vadd.xlane.f32.xlu0 %v286
        %v333 = vpop.xlane.xlu0 %332
        %334 = vadd.xlane.f32.xlu0 %v287
        %v335 = vpop.xlane.xlu0 %334
        %336 = vadd.xlane.f32.xlu0 %v288
        %v337 = vpop.xlane.xlu0 %336
        %338 = vadd.xlane.f32.xlu0 %v289
        %v339 = vpop.xlane.xlu0 %338
        %340 = vadd.xlane.f32.xlu0 %v290
        %v341 = vpop.xlane.xlu0 %340
        %342 = vadd.xlane.f32.xlu0 %v291
        %v343 = vpop.xlane.xlu0 %342
        %344 = vadd.xlane.f32.xlu0 %v292
        %v345 = vpop.xlane.xlu0 %344
        %346 = vadd.xlane.f32.xlu0 %v293
        %v347 = vpop.xlane.xlu0 %346
        %348 = vadd.xlane.f32.xlu0 %v294
        %v349 = vpop.xlane.xlu0 %348
        %350 = vadd.xlane.f32.xlu0 %v295
        %v351 = vpop.xlane.xlu0 %350
        %352 = vadd.xlane.f32.xlu0 %v296
        %v353 = vpop.xlane.xlu0 %352
        %354 = vadd.xlane.f32.xlu0 %v297
        %v355 = vpop.xlane.xlu0 %354
        %356 = vadd.xlane.f32.xlu0 %v298
        %v357 = vpop.xlane.xlu0 %356
        %358 = vadd.xlane.f32.xlu0 %v299
        %v359 = vpop.xlane.xlu0 %358
        %360 = vadd.xlane.f32.xlu0 %v300
        %v361 = vpop.xlane.xlu0 %360
        %362 = vadd.xlane.f32.xlu0 %v301
        %v363 = vpop.xlane.xlu0 %362
        %364 = vadd.xlane.f32.xlu0 %v302
        %v365 = vpop.xlane.xlu0 %364
        %366 = vadd.xlane.f32.xlu0 %v303
        %v367 = vpop.xlane.xlu0 %366
        %v368 = vmax.f32 %v305, 1e-24
        %v369 = vmax.f32 %v307, 1e-24
        %v370 = vmax.f32 %v309, 1e-24
        %v371 = vmax.f32 %v311, 1e-24
        %v372 = vmax.f32 %v313, 1e-24
        %v373 = vmax.f32 %v315, 1e-24
        %v374 = vmax.f32 %v317, 1e-24
        %v375 = vmax.f32 %v319, 1e-24
        %v376 = vmax.f32 %v321, 1e-24
        %v377 = vmax.f32 %v323, 1e-24
        %v378 = vmax.f32 %v325, 1e-24
        %v379 = vmax.f32 %v327, 1e-24
        %v380 = vmax.f32 %v329, 1e-24
        %v381 = vmax.f32 %v331, 1e-24
        %v382 = vmax.f32 %v333, 1e-24
        %v383 = vmax.f32 %v335, 1e-24
        %v384 = vmax.f32 %v337, 1e-24
        %v385 = vmax.f32 %v339, 1e-24
        %v386 = vmax.f32 %v341, 1e-24
        %v387 = vmax.f32 %v343, 1e-24
        %v388 = vmax.f32 %v345, 1e-24
        %v389 = vmax.f32 %v347, 1e-24
        %v390 = vmax.f32 %v349, 1e-24
        %v391 = vmax.f32 %v351, 1e-24
        %v392 = vmax.f32 %v353, 1e-24
        %v393 = vmax.f32 %v355, 1e-24
        %v394 = vmax.f32 %v357, 1e-24
        %v395 = vmax.f32 %v359, 1e-24
        %v396 = vmax.f32 %v361, 1e-24
        %v397 = vmax.f32 %v363, 1e-24
        %v398 = vmax.f32 %v365, 1e-24
        %v399 = vmax.f32 %v367, 1e-24
        %v400 = vrsqrt.pop %v368
        %v401 = vrsqrt.pop %v369
        %v402 = vrsqrt.pop %v370
        %v403 = vrsqrt.pop %v371
        %v404 = vrsqrt.pop %v372
        %v405 = vrsqrt.pop %v373
        %v406 = vrsqrt.pop %v374
        %v407 = vrsqrt.pop %v375
        %v408 = vrsqrt.pop %v376
        %v409 = vrsqrt.pop %v377
        %v410 = vrsqrt.pop %v378
        %v411 = vrsqrt.pop %v379
        %v412 = vrsqrt.pop %v380
        %v413 = vrsqrt.pop %v381
        %v414 = vrsqrt.pop %v382
        %v415 = vrsqrt.pop %v383
        %v416 = vrsqrt.pop %v384
        %v417 = vrsqrt.pop %v385
        %v418 = vrsqrt.pop %v386
        %v419 = vrsqrt.pop %v387
        %v420 = vrsqrt.pop %v388
        %v421 = vrsqrt.pop %v389
        %v422 = vrsqrt.pop %v390
        %v423 = vrsqrt.pop %v391
        %v424 = vrsqrt.pop %v392
        %v425 = vrsqrt.pop %v393
        %v426 = vrsqrt.pop %v394
        %v427 = vrsqrt.pop %v395
        %v428 = vrsqrt.pop %v396
        %v429 = vrsqrt.pop %v397
        %v430 = vrsqrt.pop %v398
        %v431 = vrsqrt.pop %v399
        %v432 = vmul.f32 %v240, %v400
        %v433 = vmul.f32 %v241, %v401
        %v434 = vmul.f32 %v242, %v402
        %v435 = vmul.f32 %v243, %v403
        %v436 = vmul.f32 %v244, %v404
        %v437 = vmul.f32 %v245, %v405
        %v438 = vmul.f32 %v246, %v406
        %v439 = vmul.f32 %v247, %v407
        %v440 = vmul.f32 %v248, %v408
        %v441 = vmul.f32 %v249, %v409
        %v442 = vmul.f32 %v250, %v410
        %v443 = vmul.f32 %v251, %v411
        %v444 = vmul.f32 %v252, %v412
        %v445 = vmul.f32 %v253, %v413
        %v446 = vmul.f32 %v254, %v414
        %v447 = vmul.f32 %v255, %v415
        %v448 = vmul.f32 %v256, %v416
        %v449 = vmul.f32 %v257, %v417
        %v450 = vmul.f32 %v258, %v418
        %v451 = vmul.f32 %v259, %v419
        %v452 = vmul.f32 %v260, %v420
        %v453 = vmul.f32 %v261, %v421
        %v454 = vmul.f32 %v262, %v422
        %v455 = vmul.f32 %v263, %v423
        %v456 = vmul.f32 %v264, %v424
        %v457 = vmul.f32 %v265, %v425
        %v458 = vmul.f32 %v266, %v426
        %v459 = vmul.f32 %v267, %v427
        %v460 = vmul.f32 %v268, %v428
        %v461 = vmul.f32 %v269, %v429
        %v462 = vmul.f32 %v270, %v430
        %v463 = vmul.f32 %v271, %v431
        %464 = vmatprep.subr.mxu0 0.0
        %465 = vmatpush1.xpose.msra.mxu0 %v432
        %466 = vmatprep.subr.mxu0 0.0
        %467 = vmatpush1.xpose.msra.mxu0 %v433
        %468 = vmatprep.subr.mxu0 0.0
        %469 = vmatpush1.xpose.msra.mxu0 %v434
        %470 = vmatprep.subr.mxu0 0.0
        %471 = vmatpush1.xpose.msra.mxu0 %v435
        %472 = vmatprep.subr.mxu0 0.0
        %473 = vmatpush1.xpose.msra.mxu0 %v436
        %474 = vmatprep.subr.mxu0 0.0
        %475 = vmatpush1.xpose.msra.mxu0 %v437
        %476 = vmatprep.subr.mxu0 0.0
        %477 = vmatpush1.xpose.msra.mxu0 %v438
        %478 = vmatprep.subr.mxu0 0.0
        %479 = vmatpush1.xpose.msra.mxu0 %v439
        %480 = vmatprep.subr.mxu0 0.0
        %481 = vmatpush1.xpose.msra.mxu0 %v440
        %482 = vmatprep.subr.mxu0 0.0
        %483 = vmatpush1.xpose.msra.mxu0 %v441
        %484 = vmatprep.subr.mxu0 0.0
        %485 = vmatpush1.xpose.msra.mxu0 %v442
        %486 = vmatprep.subr.mxu0 0.0
        %487 = vmatpush1.xpose.msra.mxu0 %v443
        %488 = vmatprep.subr.mxu0 0.0
        %489 = vmatpush1.xpose.msra.mxu0 %v444
        %490 = vmatprep.subr.mxu0 0.0
        %491 = vmatpush1.xpose.msra.mxu0 %v445
        %492 = vmatprep.subr.mxu0 0.0
        %493 = vmatpush1.xpose.msra.mxu0 %v446
        %494 = vmatprep.subr.mxu0 0.0
        %495 = vmatpush1.xpose.msra.mxu0 %v447
        %496 = vmatprep.subr.mxu0 0.0
        %497 = vmatpush1.xpose.msra.mxu0 %v448
        %498 = vmatprep.subr.mxu0 0.0
        %499 = vmatpush1.xpose.msra.mxu0 %v449
        %500 = vmatprep.subr.mxu0 0.0
        %501 = vmatpush1.xpose.msra.mxu0 %v450
        %502 = vmatprep.subr.mxu0 0.0
        %503 = vmatpush1.xpose.msra.mxu0 %v451
        %504 = vmatprep.subr.mxu0 0.0
        %505 = vmatpush1.xpose.msra.mxu0 %v452
        %506 = vmatprep.subr.mxu0 0.0
        %507 = vmatpush1.xpose.msra.mxu0 %v453
        %508 = vmatprep.subr.mxu0 0.0
        %509 = vmatpush1.xpose.msra.mxu0 %v454
        %510 = vmatprep.subr.mxu0 0.0
        %511 = vmatpush1.xpose.msra.mxu0 %v455
        %512 = vmatprep.subr.mxu0 0.0
        %513 = vmatpush1.xpose.msra.mxu0 %v456
        %514 = vmatprep.subr.mxu0 0.0
        %515 = vmatpush1.xpose.msra.mxu0 %v457
        %516 = vmatprep.subr.mxu0 0.0
        %517 = vmatpush1.xpose.msra.mxu0 %v458
        %518 = vmatprep.subr.mxu0 0.0
        %519 = vmatpush1.xpose.msra.mxu0 %v459
        %520 = vmatprep.subr.mxu0 0.0
        %521 = vmatpush1.xpose.msra.mxu0 %v460
        %522 = vmatprep.subr.mxu0 0.0
        %523 = vmatpush1.xpose.msra.mxu0 %v461
        %524 = vmatprep.subr.mxu0 0.0
        %525 = vmatpush1.xpose.msra.mxu0 %v462
        %526 = vmatprep.subr.mxu0 0.0
        %527 = vmatpush1.xpose.msra.mxu0 %v463
        %528 = vmatprep.mubr.f32.mxu0 0.0
        %529 = vmatmul.mubr.f32.gmra.mrb[0].mxu0 %v239
        %v530 = vpop.f32.mrb[0].mxu0
        %v531 = vadd.f32 0.0, %v530
        %v532 = vpop.f32.mrb[0].mxu0
        %v533 = vadd.f32 0.0, %v532
        %534 = vdwg.mxu0
        %v535 = vmul.f32 %v531, %v531
        %v536 = vmul.f32 %v533, %v533
        %v537 = vsub.f32 1.0, %v535
        %v538 = vsub.f32 1.0, %v536
        %v539 = vmax.f32 %v537, 0.0
        %v540 = vmax.f32 %v538, 0.0
        %v541 = vrsqrt.pop %v539
        %v542 = vmul.f32 %v539, %v541
        %vm543 = vcmp.eq.f32.partialorder %v539, inf
        %v544 = vsel %vm543, %v539, %v542
        %vm545 = vcmp.eq.f32.partialorder %v539, 0.0
        %v546 = vand.u32 %v539, 2147483648
        %v547 = vsel %vm545, %v546, %v544
        %v548 = vrsqrt.pop %v540
        %v549 = vmul.f32 %v540, %v548
        %vm550 = vcmp.eq.f32.partialorder %v540, inf
        %v551 = vsel %vm550, %v540, %v549
        %vm552 = vcmp.eq.f32.partialorder %v540, 0.0
        %v553 = vand.u32 %v540, 2147483648
        %v554 = vsel %vm552, %v553, %v551
        %v555 = vmul.f32 %v531, 0.87758255
        %v556 = vmul.f32 %v533, 0.87758255
        %v557 = vmul.f32 %v547, 0.47942555
        %v558 = vmul.f32 %v554, 0.47942555
        %v559 = vsub.f32 %v555, %v557
        %v560 = vsub.f32 %v556, %v558
        %vm561 = vcmp.gt.f32.partialorder %v531, -0.87758255
        %vm562 = vcmp.gt.f32.partialorder %v533, -0.87758255
        %v563 = vsub.f32 %v531, 0.23971277
        %v564 = vsub.f32 %v533, 0.23971277
        %v565 = vsel %vm561, %v559, %v563
        %v566 = vsel %vm562, %v560, %v564
        %v567 = vld [vmem:[%s237] sm:$0xff]
        %v568 = vlaneseq
        %v569 = vand.u32 %v568, 127
        %v570 = vadd.s32 %v569, 128
        %s571 = smul.u32 %s25, 256
        %v572 = vstv %s571
        %v573 = vadd.s32 %v569, %v572
        %v574 = vadd.s32 %v570, %v572
        %575 = vset.pattern.permute.xlu0 0
        %576 = vperm.xlu0 %575, %v567
        %v577 = vpop.permute.xlu0 %576
        %vm578 = vcmp.eq.s32.totalorder %v573, %v577
        %vm579 = vcmp.eq.s32.totalorder %v574, %v577
        %v580 = vsel %vm578, 1, 0
        %v581 = vsel %vm579, 1, 0
        %v582 = vcvt.s32.f32 %v580
        %v583 = vcvt.s32.f32 %v581
        %v584 = vmul.f32 %v582, 0.9
        %v585 = vmul.f32 %v583, 0.9
        %v586 = vadd.f32 %v584, 0.0001953125
        %v587 = vadd.f32 %v585, 0.0001953125
        %v588 = vsub.f32 %v565, %v531
        %v589 = vsub.f32 %v566, %v533
        %v590 = vmul.f32 %v586, %v588
        %v591 = vmul.f32 %v587, %v589
        %v592 = vadd.f32 %v531, %v590
        %v593 = vadd.f32 %v533, %v591
        %v594 = vmul.f32 %v592, 30.0
        %v595 = vmul.f32 %v593, 30.0
        %596 = vst [vmem:[%s228] sm:$0xff] %v594
        %597 = vst [vmem:[%s228 + $0x8] sm:$0xff] %v595
        %s598 = sand.u32 %s120, 1
        %s599 = scalar_lea.sflag [#allocation4], %s598
        %s600 = sand.u32 %s120, 1
        %s601 = smul.addr %s600, 16
        %s602 = scalar_lea.vmem [#allocation5], %s601
        // Predicated region
        $region37: #{tpu_custom_call.1} parent=31 // pred_check
          %p603 = pneg %p130
        $region38: #{tpu_custom_call.1} parent=31 // pred_check_branch
          %605 = sbr.rel (%p603) target = $region40
        $region39: #{tpu_custom_call.1} parent=31 // pred_region
          %s606 = smul.u32 2, %s25
          %s608 = ssub.s32 256, 256
          %609 = vsyncadd %s599, %s608
          %s610 = smul.addr %s24, 4
          %s611 = sadd.s32 %s606, %s610
          %s612 = smul.addr %s611, 128
          %s613 = scalar_lea.hbm %s3, %s612
          %s615 = sshll.u32 %s602, 4
          %s616 = int_to_ptr.vmem [resolvable:$true] %s615
          %618 = dma.vmem_to_hbm [thread:$0]  %s616, 256, %s613, %s599
        $region40: #{tpu_custom_call.1} parent=31 // pred_fallthru
          _
      $region32: #{tpu_custom_call.1} parent=5 // pred_fallthru
        _
      %p619 = scmp.le.s32.totalorder 2, %s15
      // Predicated region
      $region41: #{tpu_custom_call.1} parent=5 // pred_check
        %p620 = pneg %p619
      $region42: #{tpu_custom_call.1} parent=5 // pred_check_branch
        %622 = sbr.rel (%p620) target = $region44
      $region43: #{tpu_custom_call.1} parent=5 // pred_region
        %s623 = ssub.s32 %s15, 2
        // Predicated region
        $region45: #{tpu_custom_call.1} parent=43 // pred_check
          %p624 = pneg %p136
        $region46: #{tpu_custom_call.1} parent=43 // pred_check_branch
          %626 = sbr.rel (%p624) target = $region48
        $region47: #{tpu_custom_call.1} parent=43 // pred_region
          %s627 = sand.u32 %s121, 1
          %s628 = scalar_lea.sflag [#allocation4], %s627
          %s629 = sand.u32 %s121, 1
          %s630 = smul.addr %s629, 16
          %s631 = scalar_lea.vmem [#allocation5], %s630
          %632 = dma.done %s628, 256
        $region48: #{tpu_custom_call.1} parent=43 // pred_fallthru
          _
      $region44: #{tpu_custom_call.1} parent=5 // pred_fallthru
        _
    $region6: #{tpu_custom_call.1} parent=1 // loop_footer
      %s19 = sadd.s32 1, %s15
    $region7: #{tpu_custom_call.1} parent=1 // loop_footer_branch
      %14 = sbr.rel target = $region3
    $region8: #{tpu_custom_call.1} parent=1 // loop_exit
      _
    %633 = vsyncpa [#allocation3], 1
    %s634 = scalar_lea.sflag [#allocation3], 1
    %635 = vsyncpa %s634, 1
    %636 = vsyncpa [#allocation4], 1
    %s637 = scalar_lea.sflag [#allocation4], 1
    %638 = vsyncpa %s637, 1

</llo_original>
